<compile_context>
chip_gen: v6e
topology: v6e:2x2x1
jax: 0.10.0
libtpu: 0.0.40
codegen_flags: <defaults>
</compile_context>

<pallas_src>
import functools

import jax
import jax.numpy as jnp
from jax.experimental import pallas as pl
from jax.experimental.pallas import tpu as pltpu

LANE = 128      # lane width  (last dim)
SUBLANE = 8     # sublane width (second-to-last dim), f32


def _round_up(n: int, m: int) -> int:
    return ((n + m - 1) // m) * m


def _fused_mlp_kernel(x_ref, *refs):
    """Fused MLP: x -> [Linear -> ReLU] * (L-1) -> Linear, all inside one kernel.

    refs = (wb_0, ..., wb_{L-1}, o_ref).  Each wb packs one layer's weight (rows
    [0:k]) and bias (row round_up(k, 8)) into a single lane-padded array, where k is
    the (static) width of the activation flowing into that layer.
    """
    o_ref = refs[-1]
    wb_refs = refs[:-1]
    n_layers = len(wb_refs)

    h = x_ref[...].astype(jnp.float32)
    for i, wb_ref in enumerate(wb_refs):
        k = h.shape[-1]                        # static contraction width for this layer
        bias_row = _round_up(k, SUBLANE)
        w = wb_ref[:k, :]                      # (k, out_pad)   — zero-padded rows are exact
        b = wb_ref[bias_row:bias_row + 1, :]   # (1, out_pad)
        y = jnp.dot(h.astype(wb_ref.dtype), w, preferred_element_type=jnp.float32)
        y = y + b.astype(jnp.float32)          # bias add / ReLU kept in f32 (v5e VPU has no bf16)
        if i < n_layers - 1:
            y = jnp.maximum(y, 0.0)
        h = y
    # Store only the true output columns.  Masked store of a few lanes is negligible at
    # this size and removes the post-kernel slice from the hot path.
    o_ref[...] = h[:, : o_ref.shape[-1]].astype(o_ref.dtype)


def prepare_params(params, param_dtype=jnp.float32):
    """Pack & pad each layer's (W, b) into ONE array.  Call once at init, not per forward.

    Layer i's packed array has shape (round_up(k_i, 8) + 8, round_up(out_i, 128)):
      rows [0:in_i]         = W   (zeros below — exact)
      row  round_up(k_i, 8) = b
    where k_i is the activation width entering layer i inside the kernel (the true
    input_size for layer 0, the previous layer's padded width afterwards).
    Use param_dtype=jnp.bfloat16 to halve weight DMA bytes (accumulation stays f32).
    """
    packed = []
    prev_out_pad = None
    for li, (w, b) in enumerate(params):
        fi, fo = w.shape
        b = jnp.asarray(b).reshape(-1)
        assert b.shape[0] == fo, (
            "bias length must equal W.shape[1]; weights must be (in, out) — transpose "
            "PyTorch-native (out, in) weights before packing.")
        if li > 0:
            assert fi == params[li - 1][0].shape[1], "layer in/out dims must chain"
        k = fi if li == 0 else prev_out_pad
        out_pad = _round_up(fo, LANE)
        bias_row = _round_up(k, SUBLANE)
        wb = jnp.zeros((bias_row + SUBLANE, out_pad), param_dtype)
        wb = wb.at[:fi, :fo].set(w.astype(param_dtype))
        wb = wb.at[bias_row, :fo].set(b.astype(param_dtype))
        packed.append(wb)
        prev_out_pad = out_pad
    return tuple(packed)


@functools.partial(jax.jit, static_argnames=("output_size", "block_batch"))
def object_localization_mlp(x, packed_params, output_size, block_batch=2048):
    """Fused MLP forward.  `packed_params` must come from prepare_params (pre-padded)."""
    batch, in_dim = x.shape
    x = x.astype(jnp.float32)
    n_inputs = 1 + len(packed_params)
    out_shape = jax.ShapeDtypeStruct((batch, output_size), jnp.float32)

    use_grid = (batch >= 2 * block_batch) and (batch % block_batch == 0)
    if not use_grid:
        # Tiny / odd batches: gridless, everything VMEM-resident, single shot.
        return pl.pallas_call(
            _fused_mlp_kernel,
            out_shape=out_shape,
            in_specs=[pl.BlockSpec(memory_space=pltpu.MemorySpace.VMEM)] * n_inputs,
            out_specs=pl.BlockSpec(memory_space=pltpu.MemorySpace.VMEM),
        )(x, *packed_params)

    # Large batch: 1-D parallel grid over batch tiles (shards across v7x's 2 TCs;
    # >=512-row tiles keep v5e/v6e near HBM roofline).  Packed weights get a constant
    # index_map so they stay VMEM-resident across grid steps.
    grid = (batch // block_batch,)
    in_specs = [pl.BlockSpec((block_batch, in_dim), lambda i: (i, 0))]
    in_specs += [pl.BlockSpec(wb.shape, lambda i: (0, 0)) for wb in packed_params]
    out_specs = pl.BlockSpec((block_batch, output_size), lambda i: (i, 0))
    return pl.pallas_call(
        _fused_mlp_kernel,
        out_shape=out_shape,
        grid=grid,
        in_specs=in_specs,
        out_specs=out_specs,
        compiler_params=pltpu.CompilerParams(
            dimension_semantics=("parallel",),
            # Explicit VMEM limit: safe on all gens today (~few-hundred KiB footprint);
            # re-derive if hidden sizes grow (v7x has only 64 MiB physical VMEM).
            vmem_limit_bytes=32 * 1024 * 1024,
        ),
    )(x, *packed_params)


def init_mlp_params(key, input_size, hidden_sizes, output_size):
    """Deterministic synthetic parameters matching the module's layer shapes."""
    dims = [input_size] + list(hidden_sizes) + [output_size]
    params = []
    for i in range(len(dims) - 1):
        key, wk, bk = jax.random.split(key, 3)
        fan_in, fan_out = dims[i], dims[i + 1]
        scale = 1.0 / jnp.sqrt(jnp.float32(fan_in))
        w = jax.random.uniform(wk, (fan_in, fan_out), jnp.float32, -scale, scale)
        b = jax.random.uniform(bk, (fan_out,), jnp.float32, -scale, scale)
        params.append((w, b))
    return params


def _reference_mlp(x, params):
    h = x
    n = len(params)
    for i, (w, b) in enumerate(params):
        h = h @ w + b.reshape(1, -1)
        if i < n - 1:
            h = jnp.maximum(h, 0.0)
    return h


if __name__ == "__main__":
    input_size = 16
    hidden_sizes = [32, 32]
    output_size = 4

    key = jax.random.PRNGKey(0)
    key, pk = jax.random.split(key)
    params = init_mlp_params(pk, input_size, hidden_sizes, output_size)
    packed = prepare_params(params)   # one-time padding/packing, outside the hot path

    # Small batch -> gridless path (matches the module's typical per-scene usage).
    key, xk = jax.random.split(key)
    x_small = jax.random.normal(xk, (8, input_size), jnp.float32)
    out_small = jax.block_until_ready(
        object_localization_mlp(x_small, packed, output_size))
    ref_small = _reference_mlp(x_small, params)
    assert out_small.shape == (8, output_size)
    assert jnp.allclose(out_small, ref_small, atol=1e-5, rtol=1e-5)

    # Large batch -> 1-D parallel batch-grid path (exercises the tiled BlockSpecs).
    key, xk = jax.random.split(key)
    x_big = jax.random.normal(xk, (8192, input_size), jnp.float32)
    out_big = jax.block_until_ready(
        object_localization_mlp(x_big, packed, output_size))
    ref_big = _reference_mlp(x_big, params)
    assert out_big.shape == (8192, output_size)
    # Slightly looser tolerance: same per-row math, but max error over 32k elements.
    assert jnp.allclose(out_big, ref_big, atol=1e-4, rtol=1e-4)

    print("KERNEL_OK")
</pallas_src>

<mosaic_0001>
module attributes {stable_mosaic.version = 11 : i64} {
  func.func @_fused_mlp_kernel(%arg0: memref<8x16xf32, #tpu.memory_space<vmem>>, %arg1: memref<24x128xf32, #tpu.memory_space<vmem>>, %arg2: memref<136x128xf32, #tpu.memory_space<vmem>>, %arg3: memref<136x128xf32, #tpu.memory_space<vmem>>, %arg4: memref<8x4xf32, #tpu.memory_space<vmem>>) attributes {dimension_semantics = [], scalar_prefetch = 0 : i64, scratch_operands = 0 : i64, tpu.core_type = #tpu.core_type<tc>} {
    %c0 = arith.constant 0 : index
    %c0_0 = arith.constant 0 : index
    %0 = vector.load %arg0[%c0, %c0_0] : memref<8x16xf32, #tpu.memory_space<vmem>>, vector<8x16xf32>
    %c0_1 = arith.constant 0 : index
    %c0_2 = arith.constant 0 : index
    %1 = vector.load %arg1[%c0_1, %c0_2] : memref<24x128xf32, #tpu.memory_space<vmem>>, vector<16x128xf32>
    %c16 = arith.constant 16 : index
    %c0_3 = arith.constant 0 : index
    %2 = vector.load %arg1[%c16, %c0_3] : memref<24x128xf32, #tpu.memory_space<vmem>>, vector<1x128xf32>
    %cst = arith.constant dense<0.000000e+00> : vector<8x128xf32>
    %3 = tpu.matmul %0, %1, %cst {dimension_numbers = #tpu.dot_dimension_numbers<[1], [0], [0], [1], [0, 0, 1, 1], [], []>} : vector<8x16xf32>, vector<16x128xf32>, vector<8x128xf32> -> vector<8x128xf32>
    %4 = vector.broadcast %2 : vector<1x128xf32> to vector<8x128xf32>
    %5 = arith.addf %3, %4 : vector<8x128xf32>
    %cst_4 = arith.constant 0.000000e+00 : f32
    %6 = vector.broadcast %cst_4 : f32 to vector<8x128xf32>
    %7 = arith.maximumf %5, %6 : vector<8x128xf32>
    %c0_5 = arith.constant 0 : index
    %c0_6 = arith.constant 0 : index
    %8 = vector.load %arg2[%c0_5, %c0_6] : memref<136x128xf32, #tpu.memory_space<vmem>>, vector<128x128xf32>
    %c128 = arith.constant 128 : index
    %c0_7 = arith.constant 0 : index
    %9 = vector.load %arg2[%c128, %c0_7] : memref<136x128xf32, #tpu.memory_space<vmem>>, vector<1x128xf32>
    %cst_8 = arith.constant dense<0.000000e+00> : vector<8x128xf32>
    %10 = tpu.matmul %7, %8, %cst_8 {dimension_numbers = #tpu.dot_dimension_numbers<[1], [0], [0], [1], [0, 0, 1, 1], [], []>} : vector<8x128xf32>, vector<128x128xf32>, vector<8x128xf32> -> vector<8x128xf32>
    %11 = vector.broadcast %9 : vector<1x128xf32> to vector<8x128xf32>
    %12 = arith.addf %10, %11 : vector<8x128xf32>
    %cst_9 = arith.constant 0.000000e+00 : f32
    %13 = vector.broadcast %cst_9 : f32 to vector<8x128xf32>
    %14 = arith.maximumf %12, %13 : vector<8x128xf32>
    %c0_10 = arith.constant 0 : index
    %c0_11 = arith.constant 0 : index
    %15 = vector.load %arg3[%c0_10, %c0_11] : memref<136x128xf32, #tpu.memory_space<vmem>>, vector<128x128xf32>
    %c128_12 = arith.constant 128 : index
    %c0_13 = arith.constant 0 : index
    %16 = vector.load %arg3[%c128_12, %c0_13] : memref<136x128xf32, #tpu.memory_space<vmem>>, vector<1x128xf32>
    %cst_14 = arith.constant dense<0.000000e+00> : vector<8x128xf32>
    %17 = tpu.matmul %14, %15, %cst_14 {dimension_numbers = #tpu.dot_dimension_numbers<[1], [0], [0], [1], [0, 0, 1, 1], [], []>} : vector<8x128xf32>, vector<128x128xf32>, vector<8x128xf32> -> vector<8x128xf32>
    %18 = vector.broadcast %16 : vector<1x128xf32> to vector<8x128xf32>
    %19 = arith.addf %17, %18 : vector<8x128xf32>
    %20 = vector.extract_strided_slice %19 {offsets = [0, 0], sizes = [8, 4], strides = [1, 1]} : vector<8x128xf32> to vector<8x4xf32>
    %c0_15 = arith.constant 0 : index
    %c0_16 = arith.constant 0 : index
    %21 = vector.load %arg4[%c0_15, %c0_16] : memref<8x4xf32, #tpu.memory_space<vmem>>, vector<8x4xf32>
    tpu.vector_store %arg4[%c0_15, %c0_16], %20 {strides = array<i32>} : memref<8x4xf32, #tpu.memory_space<vmem>>, vector<8x4xf32>,
    return
  }
}

</mosaic_0001>

<llo_original>
// kernel: object_localization_mlp.1
$region0: #{object_localization_mlp.1}
  #allocation0 [shape = 'u32[]', space=smem, size = 0x4, offset = 0x4, fixed_abs, tag = 'smem constant byte address 0x4 - core index']
  #allocation1 [shape = 'u32[144,128]{1,0:T(1,128)}', space=vmem, size = 0x12000, scoped, tag = 'internal scratch']
  %s0 = inlined_call_operand.hbm [shape: f32[8,16], index: 0, kind: input, shape index: {}]
  %s1 = inlined_call_operand.hbm [shape: f32[24,128], index: 1, kind: input, shape index: {}]
  %s2 = inlined_call_operand.hbm [shape: f32[136,128], index: 2, kind: input, shape index: {}]
  %s3 = inlined_call_operand.hbm [shape: f32[136,128], index: 3, kind: input, shape index: {}]
  %s4 = inlined_call_operand.vmem [shape: f32[8,4], index: 4, kind: output, shape index: {}]
  %s5 = sld [smem:[#allocation0]]
  $region42: #{object_localization_mlp.1} parent=0
    _
  %s7 = ssub.s32 1, %s5
  %s8 = scalar_select 0, %s7, %s5
  $region1: #{object_localization_mlp.1} parent=0
    #allocation2 [shape = 'u8[4096]{0}', space=vmem, size = 0x1000, scoped, tag = 'input window, operand 0, single buffered']
    #allocation3 [shape = 's32[1]{0}', space=sflag, size = 0x4, scoped, tag = 'scoped memory for object_localization_mlp.1']
    #allocation4 [shape = 'u8[12288]{0}', space=vmem, size = 0x3000, scoped, tag = 'input window, operand 1, single buffered']
    #allocation5 [shape = 's32[1]{0}', space=sflag, size = 0x4, scoped, tag = 'scoped memory for object_localization_mlp.1']
    #allocation6 [shape = 'u8[69632]{0}', space=vmem, size = 0x11000, scoped, tag = 'input window, operand 2, single buffered']
    #allocation7 [shape = 'u8[69632]{0}', space=vmem, size = 0x11000, scoped, tag = 'input window, operand 3, single buffered']
    #allocation8 [shape = 's32[1]{0}', space=sflag, size = 0x4, scoped, tag = 'scoped memory for object_localization_mlp.1']
    %9 = vsyncpa [#allocation3], 0
    %10 = vsyncpa [#allocation5], 0
    %11 = vsyncpa [#allocation8], 0
    // Predicated region
    $region2: #{object_localization_mlp.1} parent=1 // pred_check
      _
    $region3: #{object_localization_mlp.1} parent=1 // pred_check_branch
      %13 = sbr.rel (0) target = $region5
    $region4: #{object_localization_mlp.1} parent=1 // pred_region
      %s15 = ssub.s32 128, 128
      %16 = vsyncadd [#allocation3], %s15
      %s18 = sshll.u32 [#allocation2], 4
      %s19 = int_to_ptr.vmem [resolvable:$true] %s18
      %21 = dma.hbm_to_vmem [thread:$0]  %s0, 128, %s19, [#allocation3]
    $region5: #{object_localization_mlp.1} parent=1 // pred_fallthru
      _
    // Predicated region
    $region6: #{object_localization_mlp.1} parent=1 // pred_check
      _
    $region7: #{object_localization_mlp.1} parent=1 // pred_check_branch
      %23 = sbr.rel (0) target = $region9
    $region8: #{object_localization_mlp.1} parent=1 // pred_region
      %s25 = ssub.s32 384, 384
      %26 = vsyncadd [#allocation5], %s25
      %s27 = sshll.u32 [#allocation4], 4
      %s28 = int_to_ptr.vmem [resolvable:$true] %s27
      %33 = dma.hbm_to_vmem [thread:$0]  %s1, 384, %s28, [#allocation5], 128, 128, 8
    $region9: #{object_localization_mlp.1} parent=1 // pred_fallthru
      _
    // Predicated region
    $region10: #{object_localization_mlp.1} parent=1 // pred_check
      _
    $region11: #{object_localization_mlp.1} parent=1 // pred_check_branch
      %35 = sbr.rel (0) target = $region13
    $region12: #{object_localization_mlp.1} parent=1 // pred_region
      %s37 = ssub.s32 2176, 2176
      %38 = vsyncadd [#allocation5], %s37
      %s39 = sshll.u32 [#allocation6], 4
      %s40 = int_to_ptr.vmem [resolvable:$true] %s39
      %45 = dma.hbm_to_vmem [thread:$0]  %s2, 2176, %s40, [#allocation5], 128, 128, 8
    $region13: #{object_localization_mlp.1} parent=1 // pred_fallthru
      _
    // Predicated region
    $region14: #{object_localization_mlp.1} parent=1 // pred_check
      _
    $region15: #{object_localization_mlp.1} parent=1 // pred_check_branch
      %47 = sbr.rel (0) target = $region17
    $region16: #{object_localization_mlp.1} parent=1 // pred_region
      %s49 = ssub.s32 2176, 2176
      %50 = vsyncadd [#allocation8], %s49
      %s51 = sshll.u32 [#allocation7], 4
      %s52 = int_to_ptr.vmem [resolvable:$true] %s51
      %57 = dma.hbm_to_vmem [thread:$0]  %s3, 2176, %s52, [#allocation8], 128, 128, 8
    $region17: #{object_localization_mlp.1} parent=1 // pred_fallthru
      _
    // Predicated region
    $region18: #{object_localization_mlp.1} parent=1 // pred_check
      _
    $region19: #{object_localization_mlp.1} parent=1 // pred_check_branch
      %59 = sbr.rel (0) target = $region21
    $region20: #{object_localization_mlp.1} parent=1 // pred_region
      %60 = dma.done [#allocation3], 128
    $region21: #{object_localization_mlp.1} parent=1 // pred_fallthru
      _
    // Predicated region
    $region22: #{object_localization_mlp.1} parent=1 // pred_check
      _
    $region23: #{object_localization_mlp.1} parent=1 // pred_check_branch
      %62 = sbr.rel (0) target = $region25
    $region24: #{object_localization_mlp.1} parent=1 // pred_region
      %63 = dma.done [#allocation5], 384
    $region25: #{object_localization_mlp.1} parent=1 // pred_fallthru
      _
    // Predicated region
    $region26: #{object_localization_mlp.1} parent=1 // pred_check
      _
    $region27: #{object_localization_mlp.1} parent=1 // pred_check_branch
      %65 = sbr.rel (0) target = $region29
    $region28: #{object_localization_mlp.1} parent=1 // pred_region
      %66 = dma.done [#allocation5], 2176
    $region29: #{object_localization_mlp.1} parent=1 // pred_fallthru
      _
    // Predicated region
    $region30: #{object_localization_mlp.1} parent=1 // pred_check
      _
    $region31: #{object_localization_mlp.1} parent=1 // pred_check_branch
      %68 = sbr.rel (0) target = $region33
    $region32: #{object_localization_mlp.1} parent=1 // pred_region
      %69 = dma.done [#allocation8], 2176
    $region33: #{object_localization_mlp.1} parent=1 // pred_fallthru
      _
    %v70 = vld [vmem:[#allocation2] sm:$0xff]
    %v71 = vld [vmem:[#allocation4] sm:$0xff]
    %v72 = vld [vmem:[#allocation4 + $0x8] sm:$0xff]
    %v73 = vld [vmem:[#allocation4 + $0x10] sm:$0x1]
    %v74 = vlaneseq
    %v75 = vshrl.u32 %v74, 7
    %v76 = vsub.s32 0, %v75
    %v77 = vrot.slane %v73, %v76
    %vm78 = vcmask 130048
    %v80 = vsel %vm78, %v70, 0
    %82 = vmatprep.subr.mxu0 0.0
    %83 = vmatpush1.msra.mxu0 0.0
    %84 = vmatprep.subr.mxu0 0.0
    %85 = vmatpush1.msra.mxu0 0.0
    %86 = vmatprep.subr.mxu0 0.0
    %87 = vmatpush1.msra.mxu0 0.0
    %88 = vmatprep.subr.mxu0 0.0
    %89 = vmatpush1.msra.mxu0 0.0
    %90 = vmatprep.subr.mxu0 0.0
    %91 = vmatpush1.msra.mxu0 0.0
    %92 = vmatprep.subr.mxu0 0.0
    %93 = vmatpush1.msra.mxu0 0.0
    %94 = vmatprep.subr.mxu0 0.0
    %95 = vmatpush1.msra.mxu0 0.0
    %96 = vmatprep.subr.mxu0 0.0
    %97 = vmatpush1.msra.mxu0 0.0
    %98 = vmatprep.subr.mxu0 0.0
    %99 = vmatpush1.msra.mxu0 0.0
    %100 = vmatprep.subr.mxu0 0.0
    %101 = vmatpush1.msra.mxu0 0.0
    %102 = vmatprep.subr.mxu0 0.0
    %103 = vmatpush1.msra.mxu0 0.0
    %104 = vmatprep.subr.mxu0 0.0
    %105 = vmatpush1.msra.mxu0 0.0
    %106 = vmatprep.subr.mxu0 0.0
    %107 = vmatpush1.msra.mxu0 0.0
    %108 = vmatprep.subr.mxu0 0.0
    %109 = vmatpush1.msra.mxu0 0.0
    %110 = vmatprep.subr.mxu0 0.0
    %111 = vmatpush1.msra.mxu0 %v72
    %112 = vmatprep.subr.mxu0 0.0
    %113 = vmatpush1.msra.mxu0 %v71
    %114 = vmatprep.subr.mxu0 0.0
    %115 = vmatpush2.msra.mxu0 0.0
    %116 = vmatprep.subr.mxu0 0.0
    %117 = vmatpush2.msra.mxu0 0.0
    %118 = vmatprep.subr.mxu0 0.0
    %119 = vmatpush2.msra.mxu0 0.0
    %120 = vmatprep.subr.mxu0 0.0
    %121 = vmatpush2.msra.mxu0 0.0
    %122 = vmatprep.subr.mxu0 0.0
    %123 = vmatpush2.msra.mxu0 0.0
    %124 = vmatprep.subr.mxu0 0.0
    %125 = vmatpush2.msra.mxu0 0.0
    %126 = vmatprep.subr.mxu0 0.0
    %127 = vmatpush2.msra.mxu0 0.0
    %128 = vmatprep.subr.mxu0 0.0
    %129 = vmatpush2.msra.mxu0 0.0
    %130 = vmatprep.subr.mxu0 0.0
    %131 = vmatpush2.msra.mxu0 0.0
    %132 = vmatprep.subr.mxu0 0.0
    %133 = vmatpush2.msra.mxu0 0.0
    %134 = vmatprep.subr.mxu0 0.0
    %135 = vmatpush2.msra.mxu0 0.0
    %136 = vmatprep.subr.mxu0 0.0
    %137 = vmatpush2.msra.mxu0 0.0
    %138 = vmatprep.subr.mxu0 0.0
    %139 = vmatpush2.msra.mxu0 0.0
    %140 = vmatprep.subr.mxu0 0.0
    %141 = vmatpush2.msra.mxu0 0.0
    %142 = vmatprep.subr.mxu0 0.0
    %143 = vmatpush2.msra.mxu0 0.0
    %144 = vmatprep.subr.mxu0 0.0
    %145 = vmatpush2.msra.mxu0 0.0
    %146 = vmatprep.mubr.f32.mxu0 0.0
    %147 = vmatmul.mubr.f32.gmra.mxu0 %v80
    %v148 = vpop.f32.mrf.mxu0
    %v149 = vadd.f32 %v77, %v148
    %v150 = vpop.f32.mrf.mxu0
    %151 = vdwg.mxu0
    %v152 = vmax.f32 %v149, 0.0
    %v153 = vld [vmem:[#allocation6] sm:$0xff]
    %v154 = vld [vmem:[#allocation6 + $0x8] sm:$0xff]
    %v155 = vld [vmem:[#allocation6 + $0x10] sm:$0xff]
    %v156 = vld [vmem:[#allocation6 + $0x18] sm:$0xff]
    %v157 = vld [vmem:[#allocation6 + $0x20] sm:$0xff]
    %v158 = vld [vmem:[#allocation6 + $0x28] sm:$0xff]
    %v159 = vld [vmem:[#allocation6 + $0x30] sm:$0xff]
    %v160 = vld [vmem:[#allocation6 + $0x38] sm:$0xff]
    %v161 = vld [vmem:[#allocation6 + $0x40] sm:$0xff]
    %v162 = vld [vmem:[#allocation6 + $0x48] sm:$0xff]
    %v163 = vld [vmem:[#allocation6 + $0x50] sm:$0xff]
    %v164 = vld [vmem:[#allocation6 + $0x58] sm:$0xff]
    %v165 = vld [vmem:[#allocation6 + $0x60] sm:$0xff]
    %v166 = vld [vmem:[#allocation6 + $0x68] sm:$0xff]
    %v167 = vld [vmem:[#allocation6 + $0x70] sm:$0xff]
    %v168 = vld [vmem:[#allocation6 + $0x78] sm:$0xff]
    %v169 = vld [vmem:[#allocation6 + $0x80] sm:$0x1]
    %v170 = vlaneseq
    %v171 = vshrl.u32 %v170, 7
    %v172 = vsub.s32 0, %v171
    %v173 = vrot.slane %v169, %v172
    %174 = vmatprep.subr.mxu0 0.0
    %175 = vmatpush1.msra.mxu0 %v168
    %176 = vmatprep.subr.mxu0 0.0
    %177 = vmatpush1.msra.mxu0 %v167
    %178 = vmatprep.subr.mxu0 0.0
    %179 = vmatpush1.msra.mxu0 %v166
    %180 = vmatprep.subr.mxu0 0.0
    %181 = vmatpush1.msra.mxu0 %v165
    %182 = vmatprep.subr.mxu0 0.0
    %183 = vmatpush1.msra.mxu0 %v164
    %184 = vmatprep.subr.mxu0 0.0
    %185 = vmatpush1.msra.mxu0 %v163
    %186 = vmatprep.subr.mxu0 0.0
    %187 = vmatpush1.msra.mxu0 %v162
    %188 = vmatprep.subr.mxu0 0.0
    %189 = vmatpush1.msra.mxu0 %v161
    %190 = vmatprep.subr.mxu0 0.0
    %191 = vmatpush1.msra.mxu0 %v160
    %192 = vmatprep.subr.mxu0 0.0
    %193 = vmatpush1.msra.mxu0 %v159
    %194 = vmatprep.subr.mxu0 0.0
    %195 = vmatpush1.msra.mxu0 %v158
    %196 = vmatprep.subr.mxu0 0.0
    %197 = vmatpush1.msra.mxu0 %v157
    %198 = vmatprep.subr.mxu0 0.0
    %199 = vmatpush1.msra.mxu0 %v156
    %200 = vmatprep.subr.mxu0 0.0
    %201 = vmatpush1.msra.mxu0 %v155
    %202 = vmatprep.subr.mxu0 0.0
    %203 = vmatpush1.msra.mxu0 %v154
    %204 = vmatprep.subr.mxu0 0.0
    %205 = vmatpush1.msra.mxu0 %v153
    %206 = vmatprep.subr.mxu0 0.0
    %207 = vmatpush2.msra.mxu0 0.0
    %208 = vmatprep.subr.mxu0 0.0
    %209 = vmatpush2.msra.mxu0 0.0
    %210 = vmatprep.subr.mxu0 0.0
    %211 = vmatpush2.msra.mxu0 0.0
    %212 = vmatprep.subr.mxu0 0.0
    %213 = vmatpush2.msra.mxu0 0.0
    %214 = vmatprep.subr.mxu0 0.0
    %215 = vmatpush2.msra.mxu0 0.0
    %216 = vmatprep.subr.mxu0 0.0
    %217 = vmatpush2.msra.mxu0 0.0
    %218 = vmatprep.subr.mxu0 0.0
    %219 = vmatpush2.msra.mxu0 0.0
    %220 = vmatprep.subr.mxu0 0.0
    %221 = vmatpush2.msra.mxu0 0.0
    %222 = vmatprep.subr.mxu0 0.0
    %223 = vmatpush2.msra.mxu0 0.0
    %224 = vmatprep.subr.mxu0 0.0
    %225 = vmatpush2.msra.mxu0 0.0
    %226 = vmatprep.subr.mxu0 0.0
    %227 = vmatpush2.msra.mxu0 0.0
    %228 = vmatprep.subr.mxu0 0.0
    %229 = vmatpush2.msra.mxu0 0.0
    %230 = vmatprep.subr.mxu0 0.0
    %231 = vmatpush2.msra.mxu0 0.0
    %232 = vmatprep.subr.mxu0 0.0
    %233 = vmatpush2.msra.mxu0 0.0
    %234 = vmatprep.subr.mxu0 0.0
    %235 = vmatpush2.msra.mxu0 0.0
    %236 = vmatprep.subr.mxu0 0.0
    %237 = vmatpush2.msra.mxu0 0.0
    %238 = vmatprep.mubr.f32.mxu0 0.0
    %239 = vmatmul.mubr.f32.gmra.mxu0 %v152
    %v240 = vpop.f32.mrf.mxu0
    %v241 = vadd.f32 %v173, %v240
    %v242 = vpop.f32.mrf.mxu0
    %243 = vdwg.mxu0
    %v244 = vmax.f32 %v241, 0.0
    %v245 = vld [vmem:[#allocation7] sm:$0xff]
    %v246 = vld [vmem:[#allocation7 + $0x8] sm:$0xff]
    %v247 = vld [vmem:[#allocation7 + $0x10] sm:$0xff]
    %v248 = vld [vmem:[#allocation7 + $0x18] sm:$0xff]
    %v249 = vld [vmem:[#allocation7 + $0x20] sm:$0xff]
    %v250 = vld [vmem:[#allocation7 + $0x28] sm:$0xff]
    %v251 = vld [vmem:[#allocation7 + $0x30] sm:$0xff]
    %v252 = vld [vmem:[#allocation7 + $0x38] sm:$0xff]
    %v253 = vld [vmem:[#allocation7 + $0x40] sm:$0xff]
    %v254 = vld [vmem:[#allocation7 + $0x48] sm:$0xff]
    %v255 = vld [vmem:[#allocation7 + $0x50] sm:$0xff]
    %v256 = vld [vmem:[#allocation7 + $0x58] sm:$0xff]
    %v257 = vld [vmem:[#allocation7 + $0x60] sm:$0xff]
    %v258 = vld [vmem:[#allocation7 + $0x68] sm:$0xff]
    %v259 = vld [vmem:[#allocation7 + $0x70] sm:$0xff]
    %v260 = vld [vmem:[#allocation7 + $0x78] sm:$0xff]
    %v261 = vld [vmem:[#allocation7 + $0x80] sm:$0x1]
    %v262 = vlaneseq
    %v263 = vshrl.u32 %v262, 7
    %v264 = vsub.s32 0, %v263
    %v265 = vrot.slane %v261, %v264
    %266 = vmatprep.subr.mxu0 0.0
    %267 = vmatpush1.msra.mxu0 %v260
    %268 = vmatprep.subr.mxu0 0.0
    %269 = vmatpush1.msra.mxu0 %v259
    %270 = vmatprep.subr.mxu0 0.0
    %271 = vmatpush1.msra.mxu0 %v258
    %272 = vmatprep.subr.mxu0 0.0
    %273 = vmatpush1.msra.mxu0 %v257
    %274 = vmatprep.subr.mxu0 0.0
    %275 = vmatpush1.msra.mxu0 %v256
    %276 = vmatprep.subr.mxu0 0.0
    %277 = vmatpush1.msra.mxu0 %v255
    %278 = vmatprep.subr.mxu0 0.0
    %279 = vmatpush1.msra.mxu0 %v254
    %280 = vmatprep.subr.mxu0 0.0
    %281 = vmatpush1.msra.mxu0 %v253
    %282 = vmatprep.subr.mxu0 0.0
    %283 = vmatpush1.msra.mxu0 %v252
    %284 = vmatprep.subr.mxu0 0.0
    %285 = vmatpush1.msra.mxu0 %v251
    %286 = vmatprep.subr.mxu0 0.0
    %287 = vmatpush1.msra.mxu0 %v250
    %288 = vmatprep.subr.mxu0 0.0
    %289 = vmatpush1.msra.mxu0 %v249
    %290 = vmatprep.subr.mxu0 0.0
    %291 = vmatpush1.msra.mxu0 %v248
    %292 = vmatprep.subr.mxu0 0.0
    %293 = vmatpush1.msra.mxu0 %v247
    %294 = vmatprep.subr.mxu0 0.0
    %295 = vmatpush1.msra.mxu0 %v246
    %296 = vmatprep.subr.mxu0 0.0
    %297 = vmatpush1.msra.mxu0 %v245
    %298 = vmatprep.subr.mxu0 0.0
    %299 = vmatpush2.msra.mxu0 0.0
    %300 = vmatprep.subr.mxu0 0.0
    %301 = vmatpush2.msra.mxu0 0.0
    %302 = vmatprep.subr.mxu0 0.0
    %303 = vmatpush2.msra.mxu0 0.0
    %304 = vmatprep.subr.mxu0 0.0
    %305 = vmatpush2.msra.mxu0 0.0
    %306 = vmatprep.subr.mxu0 0.0
    %307 = vmatpush2.msra.mxu0 0.0
    %308 = vmatprep.subr.mxu0 0.0
    %309 = vmatpush2.msra.mxu0 0.0
    %310 = vmatprep.subr.mxu0 0.0
    %311 = vmatpush2.msra.mxu0 0.0
    %312 = vmatprep.subr.mxu0 0.0
    %313 = vmatpush2.msra.mxu0 0.0
    %314 = vmatprep.subr.mxu0 0.0
    %315 = vmatpush2.msra.mxu0 0.0
    %316 = vmatprep.subr.mxu0 0.0
    %317 = vmatpush2.msra.mxu0 0.0
    %318 = vmatprep.subr.mxu0 0.0
    %319 = vmatpush2.msra.mxu0 0.0
    %320 = vmatprep.subr.mxu0 0.0
    %321 = vmatpush2.msra.mxu0 0.0
    %322 = vmatprep.subr.mxu0 0.0
    %323 = vmatpush2.msra.mxu0 0.0
    %324 = vmatprep.subr.mxu0 0.0
    %325 = vmatpush2.msra.mxu0 0.0
    %326 = vmatprep.subr.mxu0 0.0
    %327 = vmatpush2.msra.mxu0 0.0
    %328 = vmatprep.subr.mxu0 0.0
    %329 = vmatpush2.msra.mxu0 0.0
    %330 = vmatprep.mubr.f32.mxu0 0.0
    %331 = vmatmul.mubr.f32.gmra.mxu0 %v244
    %v332 = vpop.f32.mrf.mxu0
    %v333 = vadd.f32 %v265, %v332
    %v334 = vpop.f32.mrf.mxu0
    %335 = vdwg.mxu0
    %vm336 = vcmask 31744
    %337 = vst.msk [vmem:[%s4] sm:$0xff] %vm336, %v333
    // Predicated region
    $region34: #{object_localization_mlp.1} parent=1 // pred_check
      _
    $region35: #{object_localization_mlp.1} parent=1 // pred_check_branch
      %339 = sbr.rel (0) target = $region37
    $region36: #{object_localization_mlp.1} parent=1 // pred_region
      _
    $region37: #{object_localization_mlp.1} parent=1 // pred_fallthru
      _
    // Predicated region
    $region38: #{object_localization_mlp.1} parent=1 // pred_check
      _
    $region39: #{object_localization_mlp.1} parent=1 // pred_check_branch
      %341 = sbr.rel (0) target = $region41
    $region40: #{object_localization_mlp.1} parent=1 // pred_region
      _
    $region41: #{object_localization_mlp.1} parent=1 // pred_fallthru
      _
    %342 = vsyncpa [#allocation3], 1
    %343 = vsyncpa [#allocation5], 1
    %344 = vsyncpa [#allocation8], 1

</llo_original>
